<compile_context>
chip_gen: v6e
topology: v6e:2x2x1
jax: 0.10.0
libtpu: 0.0.40
codegen_flags: <defaults>
</compile_context>

<pallas_src>
import functools

import jax
import jax.numpy as jnp
from jax.experimental import pallas as pl
from jax.experimental.pallas import tpu as pltpu


def _tensorcores_per_chip():
    """2 on v7x (two TensorCores per chip); 1 on v5e / v6e (single TC)."""
    try:
        kind = getattr(jax.devices()[0], "device_kind", "") or ""
    except Exception:
        return 1
    return 2 if "v7" in kind.lower() else 1


# ----------------------------------------------------------------------------- #
# Pallas kernel: masked row-wise cross entropy, accumulated into per-core,
# per-lane vector partials.  Inputs are class-major and lane/sublane dense.
# ----------------------------------------------------------------------------- #
def _masked_ce_kernel(pred_ref, tgt_ref, msk_ref, ce_ref, cnt_ref, *, num_classes):
    """One (r_tile*128)-row tile.

    pred_ref : (D, r_tile, 128)  class-major logits (dense sublanes + lanes)
    tgt_ref  : (r_tile, 128)     int32 target class per row
    msk_ref  : (r_tile, 128)     f32 1.0 for valid rows, 0.0 otherwise
    ce_ref   : (1, r_tile, 128)  per-lane CE partial sums    (resident accumulator)
    cnt_ref  : (1, r_tile, 128)  per-lane valid-row counters (resident accumulator)
    """
    j = pl.program_id(1)

    @pl.when(j == 0)
    def _():
        ce_ref[...] = jnp.zeros_like(ce_ref)
        cnt_ref[...] = jnp.zeros_like(cnt_ref)

    D = num_classes
    tgt = tgt_ref[...]
    msk = msk_ref[...].astype(jnp.float32)

    # Pass 1 over the tiny (unrolled) class axis: row max for numerical stability
    # and on-the-fly gather of the target logit — dense elementwise VPU ops only.
    p = pred_ref[0].astype(jnp.float32)                  # (r_tile, 128)
    row_max = p
    logit_t = p                                          # default: class 0
    for d in range(1, D):
        p = pred_ref[d].astype(jnp.float32)
        row_max = jnp.maximum(row_max, p)
        logit_t = jnp.where(tgt == d, p, logit_t)

    # Pass 2: sum of exp (EUP) -> logsumexp.
    s = jnp.exp(pred_ref[0].astype(jnp.float32) - row_max)
    for d in range(1, D):
        s = s + jnp.exp(pred_ref[d].astype(jnp.float32) - row_max)
    ce = row_max + jnp.log(s) - logit_t                  # (r_tile, 128)

    # Select (not multiply): garbage logits in padded / partial-tail / clamped
    # out-of-range lanes can never reach the accumulators (their mask is 0.0).
    valid = msk != 0.0
    ce_ref[...] += jnp.where(valid, ce, 0.0)[None]
    cnt_ref[...] += msk[None]


def masked_cross_entropy_sums(pred, true, *, use_nonzero_mask=True, tl=65536,
                              num_cores=None):
    """pred, true: (N, D) logits / targets, class axis last. pred may be bf16.

    Returns (sum of CE over valid rows, number of valid rows) as f32 scalars.
    """
    N, D = pred.shape
    if num_cores is None:
        num_cores = _tensorcores_per_chip()

    # ---- Tiny fused JAX pass over `true` (no transpose, 4-5x smaller operand) --
    tgt = jnp.argmax(true, axis=-1).astype(jnp.int32)                    # (N,)
    if use_nonzero_mask:
        msk = jnp.any(true != 0, axis=-1).astype(jnp.float32)            # (N,)
    else:
        msk = jnp.ones((N,), jnp.float32)

    # ---- Class-major, sublane/lane-dense presentation of the logits ----------
    rows128 = pl.cdiv(N, 128)
    n_pad128 = rows128 * 128
    pred_cm = jnp.swapaxes(pred, 0, 1)                                   # (D, N)
    if n_pad128 != N:
        pred_cm = jnp.pad(pred_cm, ((0, 0), (0, n_pad128 - N)))
    pred3 = pred_cm.reshape(D, rows128, 128)

    # ---- Tiling ---------------------------------------------------------------
    r_req = max(1, tl // 128)
    r_cap = max(8, (((4 << 20) // (D * 128 * 4)) // 8) * 8)   # ~4 MiB pred block
    r_tile = min(r_req, r_cap, rows128)
    if r_tile < rows128 and r_tile % 8 != 0:
        r_tile = min(max(8, (r_tile // 8) * 8), rows128)
    n_tiles = pl.cdiv(rows128, r_tile)
    num_cores = max(1, min(int(num_cores), n_tiles))
    tiles_per_core = pl.cdiv(n_tiles, num_cores)
    last_tile = n_tiles - 1

    # targets / mask padded out to the full logical grid extent: every grid step
    # (including clamped out-of-range ones) reads a well-defined, all-zero mask.
    total_rows = num_cores * tiles_per_core * r_tile * 128
    tgt = jnp.pad(tgt, (0, total_rows - N)).reshape(-1, 128)
    msk = jnp.pad(msk, (0, total_rows - N)).reshape(-1, 128)

    def pred_index(c, j):
        # Fully out-of-range steps (cdiv rounding) re-read the last real block;
        # their mask block is all zeros so they contribute nothing.
        return (0, jnp.minimum(c * tiles_per_core + j, last_tile), 0)

    def row_index(c, j):
        return (c * tiles_per_core + j, 0)

    kernel = functools.partial(_masked_ce_kernel, num_classes=D)
    ce_p, cnt_p = pl.pallas_call(
        kernel,
        out_shape=(jax.ShapeDtypeStruct((num_cores, r_tile, 128), jnp.float32),
                   jax.ShapeDtypeStruct((num_cores, r_tile, 128), jnp.float32)),
        grid_spec=pltpu.PrefetchScalarGridSpec(
            num_scalar_prefetch=0,
            grid=(num_cores, tiles_per_core),
            in_specs=[pl.BlockSpec((D, r_tile, 128), pred_index),
                      pl.BlockSpec((r_tile, 128), row_index),
                      pl.BlockSpec((r_tile, 128), row_index)],
            out_specs=(pl.BlockSpec((1, r_tile, 128), lambda c, j: (c, 0, 0)),
                       pl.BlockSpec((1, r_tile, 128), lambda c, j: (c, 0, 0)))),
        compiler_params=pltpu.CompilerParams(
            dimension_semantics=("parallel", "arbitrary")),
    )(pred3, tgt, msk)
    # Tiny final reduce of the per-lane partials in JAX.
    return jnp.sum(ce_p), jnp.sum(cnt_p)


# ----------------------------------------------------------------------------- #
# TrainLossDiscrete forward (kld=False path)
# ----------------------------------------------------------------------------- #
def _safe_mean(s, c):
    return jnp.where(c > 0, s / jnp.maximum(c, 1.0), 0.0)


def _dense_ce_mean(pred, true):
    """Plain-JAX CE for the tiny graph-level y head (bs rows; no Pallas launch)."""
    p = pred.astype(jnp.float32)
    tgt = jnp.argmax(true, axis=-1)
    lse = jax.scipy.special.logsumexp(p, axis=-1)
    logit = jnp.take_along_axis(p, tgt[:, None], axis=-1)[:, 0]
    return jnp.mean(lse - logit)


def train_loss_discrete(masked_pred_X, masked_pred_E, pred_y,
                        true_X, true_E, true_y, lambda_train):
    dx = true_X.shape[-1]
    de = true_E.shape[-1]

    pX = masked_pred_X.reshape(-1, dx)
    tX = true_X.reshape(-1, dx)
    pE = masked_pred_E.reshape(-1, de)
    tE = true_E.reshape(-1, de)

    if tX.size > 0:
        sX, cX = masked_cross_entropy_sums(pX, tX, use_nonzero_mask=True)
        loss_X = _safe_mean(sX, cX)
    else:
        loss_X = jnp.float32(0.0)

    if tE.size > 0:
        sE, cE = masked_cross_entropy_sums(pE, tE, use_nonzero_mask=True)
        loss_E = _safe_mean(sE, cE)
    else:
        loss_E = jnp.float32(0.0)

    if pred_y.size > 0:
        # y is not nonzero-masked in the PyTorch module; tiny -> plain jnp.
        loss_y = _dense_ce_mean(pred_y, true_y)
    else:
        loss_y = jnp.float32(0.0)

    return loss_X + lambda_train[0] * loss_E + lambda_train[1] * loss_y


# ----------------------------------------------------------------------------- #
# Pure-JAX reference (for correctness check)
# ----------------------------------------------------------------------------- #
def _ref_sums(pred, true, use_nonzero_mask):
    if use_nonzero_mask:
        mask = jnp.any(true != 0.0, axis=-1)
    else:
        mask = jnp.ones(true.shape[0], bool)
    p = pred.astype(jnp.float32)
    tgt = jnp.argmax(true, axis=-1)
    lse = jax.scipy.special.logsumexp(p, axis=-1)
    logit = jnp.take_along_axis(p, tgt[:, None], axis=-1)[:, 0]
    ce = lse - logit
    return jnp.sum(jnp.where(mask, ce, 0.0)), jnp.sum(mask.astype(jnp.float32))


def _ref_loss(masked_pred_X, masked_pred_E, pred_y, true_X, true_E, true_y, lam):
    dx, de = true_X.shape[-1], true_E.shape[-1]
    sX, cX = _ref_sums(masked_pred_X.reshape(-1, dx), true_X.reshape(-1, dx), True)
    sE, cE = _ref_sums(masked_pred_E.reshape(-1, de), true_E.reshape(-1, de), True)
    sY, cY = _ref_sums(pred_y, true_y, False)
    return sX / cX + lam[0] * (sE / cE) + lam[1] * (sY / cY)


if __name__ == "__main__":
    key = jax.random.PRNGKey(0)
    bs, n, dx, de, dy = 2, 12, 5, 5, 4
    lambda_train = (5.0, 1.0)   # deterministic "__init__" parameter

    k1, k2, k3, k4, k5, k6, k7 = jax.random.split(key, 7)

    # One-hot targets; zero some rows to emulate masked (non-existent) nodes/edges.
    node_classes = jax.random.randint(k1, (bs, n), 0, dx)
    true_X = jax.nn.one_hot(node_classes, dx, dtype=jnp.float32)
    node_mask = jax.random.bernoulli(k2, 0.75, (bs, n)).astype(jnp.float32)
    true_X = true_X * node_mask[..., None]

    edge_classes = jax.random.randint(k3, (bs, n, n), 0, de)
    true_E = jax.nn.one_hot(edge_classes, de, dtype=jnp.float32)
    edge_mask = node_mask[:, :, None] * node_mask[:, None, :]
    true_E = true_E * edge_mask[..., None]

    y_classes = jax.random.randint(k4, (bs,), 0, dy)
    true_y = jax.nn.one_hot(y_classes, dy, dtype=jnp.float32)

    masked_pred_X = jax.random.normal(k5, (bs, n, dx), jnp.float32)
    masked_pred_E = jax.random.normal(k6, (bs, n, n, de), jnp.float32)
    pred_y = jax.random.normal(k7, (bs, dy), jnp.float32)

    # Main forward (default large tiles, auto-detected core count).
    loss = train_loss_discrete(masked_pred_X, masked_pred_E, pred_y,
                               true_X, true_E, true_y, lambda_train)
    loss = jax.block_until_ready(loss)

    ref = _ref_loss(masked_pred_X, masked_pred_E, pred_y,
                    true_X, true_E, true_y, lambda_train)
    assert jnp.allclose(loss, ref, rtol=1e-4, atol=1e-4), (loss, ref)

    # Extra check: multi-tile grid, non-multiple-of-128 row count (partial tail
    # block), forced 2-"core" split with a clamped out-of-range step.
    kA, kB, kC = jax.random.split(key, 3)
    Nbig, Dbig = 5000, 5
    pred_big = jax.random.normal(kA, (Nbig, Dbig), jnp.float32)
    cls_big = jax.random.randint(kB, (Nbig,), 0, Dbig)
    true_big = jax.nn.one_hot(cls_big, Dbig, dtype=jnp.float32)
    row_mask = jax.random.bernoulli(kC, 0.7, (Nbig,)).astype(jnp.float32)
    true_big = true_big * row_mask[:, None]

    s_big, c_big = masked_cross_entropy_sums(pred_big, true_big,
                                             use_nonzero_mask=True,
                                             tl=2048, num_cores=2)
    s_big, c_big = jax.block_until_ready((s_big, c_big))
    s_ref, c_ref = _ref_sums(pred_big, true_big, True)
    assert jnp.allclose(c_big, c_ref), (c_big, c_ref)
    assert jnp.allclose(s_big, s_ref, rtol=1e-4, atol=1e-2), (s_big, s_ref)

    print("KERNEL_OK")
</pallas_src>

<mosaic_0001>
module attributes {stable_mosaic.version = 11 : i64} {
  func.func @_masked_ce_kernel(%arg0: i32, %arg1: i32, %arg2: memref<5x1x128xf32, #tpu.memory_space<vmem>>, %arg3: memref<1x128xi32, #tpu.memory_space<vmem>>, %arg4: memref<1x128xf32, #tpu.memory_space<vmem>>, %arg5: memref<1x1x128xf32, #tpu.memory_space<vmem>>, %arg6: memref<1x1x128xf32, #tpu.memory_space<vmem>>) attributes {dimension_semantics = [#tpu.dimension_semantics<parallel>, #tpu.dimension_semantics<arbitrary>], iteration_bounds = array<i64: 1, 1>, scalar_prefetch = 0 : i64, scratch_operands = 0 : i64, tpu.core_type = #tpu.core_type<tc>, window_params = [{transform_indices = @transform_0, window_bounds = array<i64: 5, 1, 128>}, {transform_indices = @transform_1, window_bounds = array<i64: 1, 128>}, {transform_indices = @transform_2, window_bounds = array<i64: 1, 128>}, {transform_indices = @transform_3, window_bounds = array<i64: 1, 1, 128>}, {transform_indices = @transform_4, window_bounds = array<i64: 1, 1, 128>}]} {
    %c0_i32 = arith.constant 0 : i32
    %0 = arith.cmpi eq, %arg1, %c0_i32 : i32
    %1 = arith.extui %0 : i1 to i32
    %c0_i32_0 = arith.constant 0 : i32
    %2 = arith.cmpi ne, %1, %c0_i32_0 : i32
    scf.if %2 {
      %cst_43 = arith.constant 0.000000e+00 : f32
      %70 = vector.broadcast %cst_43 : f32 to vector<1x1x128xf32>
      %c0_44 = arith.constant 0 : index
      %c0_45 = arith.constant 0 : index
      %c0_46 = arith.constant 0 : index
      %71 = vector.load %arg5[%c0_44, %c0_45, %c0_46] : memref<1x1x128xf32, #tpu.memory_space<vmem>>, vector<1x1x128xf32>
      tpu.vector_store %arg5[%c0_44, %c0_45, %c0_46], %70 {strides = array<i32>} : memref<1x1x128xf32, #tpu.memory_space<vmem>>, vector<1x1x128xf32>,
      %cst_47 = arith.constant 0.000000e+00 : f32
      %72 = vector.broadcast %cst_47 : f32 to vector<1x1x128xf32>
      %c0_48 = arith.constant 0 : index
      %c0_49 = arith.constant 0 : index
      %c0_50 = arith.constant 0 : index
      %73 = vector.load %arg6[%c0_48, %c0_49, %c0_50] : memref<1x1x128xf32, #tpu.memory_space<vmem>>, vector<1x1x128xf32>
      tpu.vector_store %arg6[%c0_48, %c0_49, %c0_50], %72 {strides = array<i32>} : memref<1x1x128xf32, #tpu.memory_space<vmem>>, vector<1x1x128xf32>,
    } else {
    }
    %c0 = arith.constant 0 : index
    %c0_1 = arith.constant 0 : index
    %3 = vector.load %arg3[%c0, %c0_1] : memref<1x128xi32, #tpu.memory_space<vmem>>, vector<1x128xi32>
    %c0_2 = arith.constant 0 : index
    %c0_3 = arith.constant 0 : index
    %4 = vector.load %arg4[%c0_2, %c0_3] : memref<1x128xf32, #tpu.memory_space<vmem>>, vector<1x128xf32>
    %c0_4 = arith.constant 0 : index
    %c0_5 = arith.constant 0 : index
    %c0_6 = arith.constant 0 : index
    %5 = vector.load %arg2[%c0_4, %c0_5, %c0_6] : memref<5x1x128xf32, #tpu.memory_space<vmem>>, vector<1x1x128xf32>
    %6 = vector.shape_cast %5 : vector<1x1x128xf32> to vector<1x128xf32>
    %c1 = arith.constant 1 : index
    %c0_7 = arith.constant 0 : index
    %c0_8 = arith.constant 0 : index
    %7 = vector.load %arg2[%c1, %c0_7, %c0_8] : memref<5x1x128xf32, #tpu.memory_space<vmem>>, vector<1x1x128xf32>
    %8 = vector.shape_cast %7 : vector<1x1x128xf32> to vector<1x128xf32>
    %9 = arith.maximumf %6, %8 : vector<1x128xf32>
    %c1_i32 = arith.constant 1 : i32
    %10 = vector.broadcast %c1_i32 : i32 to vector<1x128xi32>
    %11 = arith.cmpi eq, %3, %10 : vector<1x128xi32>
    %12 = arith.select %11, %8, %6 : vector<1x128xi1>, vector<1x128xf32>
    %c2 = arith.constant 2 : index
    %c0_9 = arith.constant 0 : index
    %c0_10 = arith.constant 0 : index
    %13 = vector.load %arg2[%c2, %c0_9, %c0_10] : memref<5x1x128xf32, #tpu.memory_space<vmem>>, vector<1x1x128xf32>
    %14 = vector.shape_cast %13 : vector<1x1x128xf32> to vector<1x128xf32>
    %15 = arith.maximumf %9, %14 : vector<1x128xf32>
    %c2_i32 = arith.constant 2 : i32
    %16 = vector.broadcast %c2_i32 : i32 to vector<1x128xi32>
    %17 = arith.cmpi eq, %3, %16 : vector<1x128xi32>
    %18 = arith.select %17, %14, %12 : vector<1x128xi1>, vector<1x128xf32>
    %c3 = arith.constant 3 : index
    %c0_11 = arith.constant 0 : index
    %c0_12 = arith.constant 0 : index
    %19 = vector.load %arg2[%c3, %c0_11, %c0_12] : memref<5x1x128xf32, #tpu.memory_space<vmem>>, vector<1x1x128xf32>
    %20 = vector.shape_cast %19 : vector<1x1x128xf32> to vector<1x128xf32>
    %21 = arith.maximumf %15, %20 : vector<1x128xf32>
    %c3_i32 = arith.constant 3 : i32
    %22 = vector.broadcast %c3_i32 : i32 to vector<1x128xi32>
    %23 = arith.cmpi eq, %3, %22 : vector<1x128xi32>
    %24 = arith.select %23, %20, %18 : vector<1x128xi1>, vector<1x128xf32>
    %c4 = arith.constant 4 : index
    %c0_13 = arith.constant 0 : index
    %c0_14 = arith.constant 0 : index
    %25 = vector.load %arg2[%c4, %c0_13, %c0_14] : memref<5x1x128xf32, #tpu.memory_space<vmem>>, vector<1x1x128xf32>
    %26 = vector.shape_cast %25 : vector<1x1x128xf32> to vector<1x128xf32>
    %27 = arith.maximumf %21, %26 : vector<1x128xf32>
    %c4_i32 = arith.constant 4 : i32
    %28 = vector.broadcast %c4_i32 : i32 to vector<1x128xi32>
    %29 = arith.cmpi eq, %3, %28 : vector<1x128xi32>
    %30 = arith.select %29, %26, %24 : vector<1x128xi1>, vector<1x128xf32>
    %c0_15 = arith.constant 0 : index
    %c0_16 = arith.constant 0 : index
    %c0_17 = arith.constant 0 : index
    %31 = vector.load %arg2[%c0_15, %c0_16, %c0_17] : memref<5x1x128xf32, #tpu.memory_space<vmem>>, vector<1x1x128xf32>
    %32 = vector.shape_cast %31 : vector<1x1x128xf32> to vector<1x128xf32>
    %33 = arith.subf %32, %27 : vector<1x128xf32>
    %34 = math.exp %33 : vector<1x128xf32>
    %c1_18 = arith.constant 1 : index
    %c0_19 = arith.constant 0 : index
    %c0_20 = arith.constant 0 : index
    %35 = vector.load %arg2[%c1_18, %c0_19, %c0_20] : memref<5x1x128xf32, #tpu.memory_space<vmem>>, vector<1x1x128xf32>
    %36 = vector.shape_cast %35 : vector<1x1x128xf32> to vector<1x128xf32>
    %37 = arith.subf %36, %27 : vector<1x128xf32>
    %38 = math.exp %37 : vector<1x128xf32>
    %39 = arith.addf %34, %38 : vector<1x128xf32>
    %c2_21 = arith.constant 2 : index
    %c0_22 = arith.constant 0 : index
    %c0_23 = arith.constant 0 : index
    %40 = vector.load %arg2[%c2_21, %c0_22, %c0_23] : memref<5x1x128xf32, #tpu.memory_space<vmem>>, vector<1x1x128xf32>
    %41 = vector.shape_cast %40 : vector<1x1x128xf32> to vector<1x128xf32>
    %42 = arith.subf %41, %27 : vector<1x128xf32>
    %43 = math.exp %42 : vector<1x128xf32>
    %44 = arith.addf %39, %43 : vector<1x128xf32>
    %c3_24 = arith.constant 3 : index
    %c0_25 = arith.constant 0 : index
    %c0_26 = arith.constant 0 : index
    %45 = vector.load %arg2[%c3_24, %c0_25, %c0_26] : memref<5x1x128xf32, #tpu.memory_space<vmem>>, vector<1x1x128xf32>
    %46 = vector.shape_cast %45 : vector<1x1x128xf32> to vector<1x128xf32>
    %47 = arith.subf %46, %27 : vector<1x128xf32>
    %48 = math.exp %47 : vector<1x128xf32>
    %49 = arith.addf %44, %48 : vector<1x128xf32>
    %c4_27 = arith.constant 4 : index
    %c0_28 = arith.constant 0 : index
    %c0_29 = arith.constant 0 : index
    %50 = vector.load %arg2[%c4_27, %c0_28, %c0_29] : memref<5x1x128xf32, #tpu.memory_space<vmem>>, vector<1x1x128xf32>
    %51 = vector.shape_cast %50 : vector<1x1x128xf32> to vector<1x128xf32>
    %52 = arith.subf %51, %27 : vector<1x128xf32>
    %53 = math.exp %52 : vector<1x128xf32>
    %54 = arith.addf %49, %53 : vector<1x128xf32>
    %55 = math.log %54 : vector<1x128xf32>
    %56 = arith.addf %27, %55 : vector<1x128xf32>
    %57 = arith.subf %56, %30 : vector<1x128xf32>
    %cst = arith.constant 0.000000e+00 : f32
    %58 = vector.broadcast %cst : f32 to vector<1x128xf32>
    %59 = arith.cmpf one, %4, %58 : vector<1x128xf32>
    %c0_30 = arith.constant 0 : index
    %c0_31 = arith.constant 0 : index
    %c0_32 = arith.constant 0 : index
    %60 = vector.load %arg5[%c0_30, %c0_31, %c0_32] : memref<1x1x128xf32, #tpu.memory_space<vmem>>, vector<1x1x128xf32>
    %cst_33 = arith.constant 0.000000e+00 : f32
    %61 = vector.broadcast %cst_33 : f32 to vector<1x128xf32>
    %62 = arith.select %59, %57, %61 : vector<1x128xi1>, vector<1x128xf32>
    %63 = vector.shape_cast %62 : vector<1x128xf32> to vector<1x1x128xf32>
    %64 = arith.addf %60, %63 : vector<1x1x128xf32>
    %c0_34 = arith.constant 0 : index
    %c0_35 = arith.constant 0 : index
    %c0_36 = arith.constant 0 : index
    %65 = vector.load %arg5[%c0_34, %c0_35, %c0_36] : memref<1x1x128xf32, #tpu.memory_space<vmem>>, vector<1x1x128xf32>
    tpu.vector_store %arg5[%c0_34, %c0_35, %c0_36], %64 {strides = array<i32>} : memref<1x1x128xf32, #tpu.memory_space<vmem>>, vector<1x1x128xf32>,
    %c0_37 = arith.constant 0 : index
    %c0_38 = arith.constant 0 : index
    %c0_39 = arith.constant 0 : index
    %66 = vector.load %arg6[%c0_37, %c0_38, %c0_39] : memref<1x1x128xf32, #tpu.memory_space<vmem>>, vector<1x1x128xf32>
    %67 = vector.shape_cast %4 : vector<1x128xf32> to vector<1x1x128xf32>
    %68 = arith.addf %66, %67 : vector<1x1x128xf32>
    %c0_40 = arith.constant 0 : index
    %c0_41 = arith.constant 0 : index
    %c0_42 = arith.constant 0 : index
    %69 = vector.load %arg6[%c0_40, %c0_41, %c0_42] : memref<1x1x128xf32, #tpu.memory_space<vmem>>, vector<1x1x128xf32>
    tpu.vector_store %arg6[%c0_40, %c0_41, %c0_42], %68 {strides = array<i32>} : memref<1x1x128xf32, #tpu.memory_space<vmem>>, vector<1x1x128xf32>,
    return
  }
  func.func @transform_0(%arg0: i32, %arg1: i32) -> (i32, i32, i32) {
    %c1_i32 = arith.constant 1 : i32
    %0 = arith.muli %arg0, %c1_i32 : i32
    %1 = arith.addi %0, %arg1 : i32
    %c0_i32 = arith.constant 0 : i32
    %2 = arith.minsi %1, %c0_i32 : i32
    %c0_i32_0 = arith.constant 0 : i32
    %c0_i32_1 = arith.constant 0 : i32
    %c0_i32_2 = arith.constant 0 : i32
    return %c0_i32_0, %2, %c0_i32_1 : i32, i32, i32
  }
  func.func @transform_1(%arg0: i32, %arg1: i32) -> (i32, i32) {
    %c1_i32 = arith.constant 1 : i32
    %0 = arith.muli %arg0, %c1_i32 : i32
    %1 = arith.addi %0, %arg1 : i32
    %c0_i32 = arith.constant 0 : i32
    %c0_i32_0 = arith.constant 0 : i32
    return %1, %c0_i32 : i32, i32
  }
  func.func @transform_2(%arg0: i32, %arg1: i32) -> (i32, i32) {
    %c1_i32 = arith.constant 1 : i32
    %0 = arith.muli %arg0, %c1_i32 : i32
    %1 = arith.addi %0, %arg1 : i32
    %c0_i32 = arith.constant 0 : i32
    %c0_i32_0 = arith.constant 0 : i32
    return %1, %c0_i32 : i32, i32
  }
  func.func @transform_3(%arg0: i32, %arg1: i32) -> (i32, i32, i32) {
    %c0_i32 = arith.constant 0 : i32
    %c0_i32_0 = arith.constant 0 : i32
    %c0_i32_1 = arith.constant 0 : i32
    return %arg0, %c0_i32, %c0_i32_0 : i32, i32, i32
  }
  func.func @transform_4(%arg0: i32, %arg1: i32) -> (i32, i32, i32) {
    %c0_i32 = arith.constant 0 : i32
    %c0_i32_0 = arith.constant 0 : i32
    %c0_i32_1 = arith.constant 0 : i32
    return %arg0, %c0_i32, %c0_i32_0 : i32, i32, i32
  }
}

</mosaic_0001>

<llo_original>
// kernel: tpu_custom_call.1
$region0: #{tpu_custom_call.1}
  #allocation0 [shape = 'u32[]', space=smem, size = 0x4, offset = 0x4, fixed_abs, tag = 'smem constant byte address 0x4 - core index']
  #allocation1 [shape = 'u32[144,128]{1,0:T(1,128)}', space=vmem, size = 0x12000, scoped, tag = 'internal scratch']
  %s0 = inlined_call_operand.hbm [shape: f32[5,1,128], index: 0, kind: input, shape index: {}]
  %s1 = inlined_call_operand.vmem [shape: s32[1,128], index: 1, kind: input, shape index: {}]
  %s2 = inlined_call_operand.vmem [shape: f32[1,128], index: 2, kind: input, shape index: {}]
  %s3 = inlined_call_operand.hbm [shape: f32[1,1,128], index: 3, kind: output, shape index: {0}]
  %s4 = inlined_call_operand.hbm [shape: f32[1,1,128], index: 4, kind: output, shape index: {1}]
  %5 = xla_tuple %s3, %s4
  %s6 = sld [smem:[#allocation0]]
  $region38: #{tpu_custom_call.1} parent=0
    _
  %s8 = ssub.s32 1, %s6
  %s9 = scalar_select 0, %s8, %s6
  $region1: #{tpu_custom_call.1} parent=0
    #allocation2 [shape = 'u8[2560]{0}', space=vmem, size = 0xc00, scoped, tag = 'input window, operand 0, single buffered']
    #allocation3 [shape = 's32[1]{0}', space=sflag, size = 0x4, scoped, tag = 'scoped memory for tpu_custom_call.1']
    #allocation4 [shape = 's32[1]{0}', space=sflag, size = 0x4, scoped, tag = 'scoped memory for tpu_custom_call.1']
    #allocation5 [shape = 'u8[512]{0}', space=vmem, size = 0x400, scoped, tag = 'output window, operand 0, single buffered']
    #allocation6 [shape = 'u8[512]{0}', space=vmem, size = 0x400, scoped, tag = 'output window, operand 1, single buffered']
    #allocation7 [shape = 's32[1]{0}', space=sflag, size = 0x4, scoped, tag = 'scoped memory for tpu_custom_call.1']
    %10 = vsyncpa [#allocation3], 0
    %11 = vsyncpa [#allocation4], 0
    %12 = vsyncpa [#allocation7], 0
    // Predicated region
    $region2: #{tpu_custom_call.1} parent=1 // pred_check
      _
    $region3: #{tpu_custom_call.1} parent=1 // pred_check_branch
      %14 = sbr.rel (0) target = $region5
    $region4: #{tpu_custom_call.1} parent=1 // pred_region
      %s15 = sadd.s32 0, 0
      %p16 = scmp.lt.s32.totalorder %s15, 0
      %s17 = scalar_select %p16, %s15, 0
      %s19 = ssub.s32 80, 80
      %20 = vsyncadd [#allocation3], %s19
      %s21 = smul.addr %s17, 16
      %s22 = scalar_lea.hbm %s0, %s21
      %s23 = sshll.u32 [#allocation2], 4
      %s24 = int_to_ptr.vmem [resolvable:$true] %s23
      %29 = dma.hbm_to_vmem [thread:$0]  %s22, 80, %s24, [#allocation3], 16, 16, 1
    $region5: #{tpu_custom_call.1} parent=1 // pred_fallthru
      _
    // Predicated region
    $region6: #{tpu_custom_call.1} parent=1 // pred_check
      _
    $region7: #{tpu_custom_call.1} parent=1 // pred_check_branch
      %31 = sbr.rel (0) target = $region9
    $region8: #{tpu_custom_call.1} parent=1 // pred_region
      %s32 = sadd.s32 0, 0
      %p33 = scmp.lt.s32.totalorder %s32, 0
      %s34 = scalar_select %p33, %s32, 0
      %s35 = scalar_lea.vmem %s1, %s34
      %s36 = sadd.s32 0, 0
    $region9: #{tpu_custom_call.1} parent=1 // pred_fallthru
      _
    // Predicated region
    $region10: #{tpu_custom_call.1} parent=1 // pred_check
      _
    $region11: #{tpu_custom_call.1} parent=1 // pred_check_branch
      %38 = sbr.rel (0) target = $region13
    $region12: #{tpu_custom_call.1} parent=1 // pred_region
      %s39 = sadd.s32 0, 0
      %p40 = scmp.lt.s32.totalorder %s39, 0
      %s41 = scalar_select %p40, %s39, 0
      %s42 = scalar_lea.vmem %s2, %s41
      %s43 = sadd.s32 0, 0
    $region13: #{tpu_custom_call.1} parent=1 // pred_fallthru
      _
    // Predicated region
    $region14: #{tpu_custom_call.1} parent=1 // pred_check
      _
    $region15: #{tpu_custom_call.1} parent=1 // pred_check_branch
      %45 = sbr.rel (0) target = $region17
    $region16: #{tpu_custom_call.1} parent=1 // pred_region
      %46 = dma.done [#allocation3], 80
    $region17: #{tpu_custom_call.1} parent=1 // pred_fallthru
      _
    %s47 = sadd.s32 0, 0
    %p48 = scmp.lt.s32.totalorder %s47, 0
    %s49 = scalar_select %p48, %s47, 0
    %s50 = scalar_lea.vmem %s1, %s49
    %s51 = sadd.s32 0, 0
    %p52 = scmp.lt.s32.totalorder %s51, 0
    %s53 = scalar_select %p52, %s51, 0
    %s54 = scalar_lea.vmem %s2, %s53
    %s55 = sadd.s32 0, 0
    %p56 = scmp.lt.s32.totalorder %s55, 0
    %s57 = scalar_select %p56, %s55, 0
    %s58 = sadd.s32 0, 0
    %p59 = scmp.lt.s32.totalorder %s58, 0
    %s60 = scalar_select %p59, %s58, 0
    %s61 = scalar_lea.vmem %s1, %s60
    %s62 = sadd.s32 0, 0
    %s63 = sadd.s32 0, 0
    %p64 = scmp.lt.s32.totalorder %s63, 0
    %s65 = scalar_select %p64, %s63, 0
    %s66 = scalar_lea.vmem %s2, %s65
    %s67 = sadd.s32 0, 0
    %p68 = scmp.eq.s32.totalorder 0, 0
    // Predicated region
    $region18: #{tpu_custom_call.1} parent=1 // pred_check
      %p69 = pneg %p68
    $region19: #{tpu_custom_call.1} parent=1 // pred_check_branch
      %71 = sbr.rel (%p69) target = $region21
    $region20: #{tpu_custom_call.1} parent=1 // pred_region
      %72 = vst [vmem:[#allocation5] sm:$0x1] 0.0
      %73 = vst [vmem:[#allocation6] sm:$0x1] 0.0
    $region21: #{tpu_custom_call.1} parent=1 // pred_fallthru
      _
    %v74 = vld [vmem:[%s61] sm:$0x1]
    %v75 = vld [vmem:[%s66] sm:$0x1]
    %v76 = vld [vmem:[#allocation2] sm:$0x1]
    %s77 = scalar_lea.vmem [#allocation2], 1
    %v78 = vld [vmem:[%s77] sm:$0x1]
    %v79 = vmax.f32 %v76, %v78
    %vm80 = vcmp.eq.s32.totalorder %v74, 1
    %v81 = vsel %vm80, %v78, %v76
    %s82 = scalar_lea.vmem [#allocation2], 2
    %v83 = vld [vmem:[%s82] sm:$0x1]
    %v84 = vmax.f32 %v79, %v83
    %vm85 = vcmp.eq.s32.totalorder %v74, 2
    %v86 = vsel %vm85, %v83, %v81
    %s87 = scalar_lea.vmem [#allocation2], 3
    %v88 = vld [vmem:[%s87] sm:$0x1]
    %v89 = vmax.f32 %v84, %v88
    %vm90 = vcmp.eq.s32.totalorder %v74, 3
    %v91 = vsel %vm90, %v88, %v86
    %s92 = scalar_lea.vmem [#allocation2], 4
    %v93 = vld [vmem:[%s92] sm:$0x1]
    %v94 = vmax.f32 %v89, %v93
    %vm95 = vcmp.eq.s32.totalorder %v74, 4
    %v96 = vsel %vm95, %v93, %v91
    %v97 = vsub.f32 %v76, %v94
    %v98 = vmul.f32 %v97, 1.442695
    %v99 = vpow.pop %v98
    %v100 = vsub.f32 %v78, %v94
    %v101 = vmul.f32 %v100, 1.442695
    %v102 = vpow.pop %v101
    %v103 = vadd.f32 %v99, %v102
    %v104 = vsub.f32 %v83, %v94
    %v105 = vmul.f32 %v104, 1.442695
    %v106 = vpow.pop %v105
    %v107 = vadd.f32 %v103, %v106
    %v108 = vsub.f32 %v88, %v94
    %v109 = vmul.f32 %v108, 1.442695
    %v110 = vpow.pop %v109
    %v111 = vadd.f32 %v107, %v110
    %v112 = vsub.f32 %v93, %v94
    %v113 = vmul.f32 %v112, 1.442695
    %v114 = vpow.pop %v113
    %v115 = vadd.f32 %v111, %v114
    %v116 = vlog2.pop %v115
    %v117 = vmul.f32 %v116, 0.6931472
    %v118 = vadd.f32 %v94, %v117
    %v119 = vsub.f32 %v118, %v96
    %vm120 = vcmp.ne.f32.partialorder %v75, 0.0
    %v121 = vld [vmem:[#allocation5] sm:$0x1]
    %v122 = vsel %vm120, %v119, 0.0
    %v123 = vadd.f32 %v121, %v122
    %124 = vst [vmem:[#allocation5] sm:$0x1] %v123
    %v125 = vld [vmem:[#allocation6] sm:$0x1]
    %v126 = vadd.f32 %v125, %v75
    %127 = vst [vmem:[#allocation6] sm:$0x1] %v126
    // Predicated region
    $region22: #{tpu_custom_call.1} parent=1 // pred_check
      _
    $region23: #{tpu_custom_call.1} parent=1 // pred_check_branch
      %129 = sbr.rel (0) target = $region25
    $region24: #{tpu_custom_call.1} parent=1 // pred_region
      %s131 = ssub.s32 16, 16
      %132 = vsyncadd [#allocation4], %s131
      %s134 = sshll.u32 [#allocation5], 4
      %s135 = int_to_ptr.vmem [resolvable:$true] %s134
      %137 = dma.vmem_to_hbm [thread:$0]  %s135, 16, %s3, [#allocation4]
    $region25: #{tpu_custom_call.1} parent=1 // pred_fallthru
      _
    // Predicated region
    $region26: #{tpu_custom_call.1} parent=1 // pred_check
      _
    $region27: #{tpu_custom_call.1} parent=1 // pred_check_branch
      %139 = sbr.rel (0) target = $region29
    $region28: #{tpu_custom_call.1} parent=1 // pred_region
      %s141 = ssub.s32 16, 16
      %142 = vsyncadd [#allocation7], %s141
      %s144 = sshll.u32 [#allocation6], 4
      %s145 = int_to_ptr.vmem [resolvable:$true] %s144
      %147 = dma.vmem_to_hbm [thread:$0]  %s145, 16, %s4, [#allocation7]
    $region29: #{tpu_custom_call.1} parent=1 // pred_fallthru
      _
    // Predicated region
    $region30: #{tpu_custom_call.1} parent=1 // pred_check
      _
    $region31: #{tpu_custom_call.1} parent=1 // pred_check_branch
      %149 = sbr.rel (0) target = $region33
    $region32: #{tpu_custom_call.1} parent=1 // pred_region
      %150 = dma.done [#allocation4], 16
    $region33: #{tpu_custom_call.1} parent=1 // pred_fallthru
      _
    // Predicated region
    $region34: #{tpu_custom_call.1} parent=1 // pred_check
      _
    $region35: #{tpu_custom_call.1} parent=1 // pred_check_branch
      %152 = sbr.rel (0) target = $region37
    $region36: #{tpu_custom_call.1} parent=1 // pred_region
      %153 = dma.done [#allocation7], 16
    $region37: #{tpu_custom_call.1} parent=1 // pred_fallthru
      _
    %154 = vsyncpa [#allocation3], 1
    %155 = vsyncpa [#allocation4], 1
    %156 = vsyncpa [#allocation7], 1

</llo_original>
